<compile_context>
chip_gen: v7x
topology: tpu7x:2x2x1
jax: 0.10.0
libtpu: 0.0.40
codegen_flags: <defaults>
</compile_context>

<pallas_src>
import functools

import jax
import jax.numpy as jnp
from jax.experimental import pallas as pl
from jax.experimental.pallas import tpu as pltpu


def _round_up(x, m):
    return ((x + m - 1) // m) * m


# -----------------------------------------------------------------------------
# Pallas kernel 1: input_proj = nn.Conv2d(num_channels, hidden_dim, kernel=1)
# A 1x1 conv is a per-pixel linear layer: [N, Cin] @ [Cin, Cout] + bias.
# -----------------------------------------------------------------------------
def _input_proj_kernel(x_ref, w_ref, b_ref, o_ref):
    x = x_ref[...].astype(jnp.bfloat16)          # bf16 operands, f32 accumulate
    o_ref[...] = (
        jnp.dot(x, w_ref[...], preferred_element_type=jnp.float32) + b_ref[...]
    )


def input_proj_pallas(x_tok, w, b, *, tm=512):
    """x_tok: [N, Cin] f32, w: [Cin, Cout] f32, b: [1, Cout] f32 -> [N, Cout] f32."""
    N, Cin = x_tok.shape
    Cout = w.shape[1]

    # pad token count to a multiple of the (8-aligned) row tile
    Npad = _round_up(N, 8)
    tm = min(tm, Npad)
    Npad = _round_up(Npad, tm)
    if Npad != N:
        x_tok = jnp.pad(x_tok, ((0, Npad - N), (0, 0)))

    w_bf = w.astype(jnp.bfloat16)                 # weight resident in VMEM as bf16

    cost = pl.CostEstimate(
        flops=2 * Npad * Cin * Cout,
        transcendentals=0,
        bytes_accessed=Npad * Cin * 4 + Cin * Cout * 2 + Cout * 4 + Npad * Cout * 4,
    )

    out = pl.pallas_call(
        _input_proj_kernel,
        out_shape=jax.ShapeDtypeStruct((Npad, Cout), jnp.float32),
        grid=(Npad // tm,),
        in_specs=[
            pl.BlockSpec((tm, Cin), lambda i: (i, 0)),
            pl.BlockSpec((Cin, Cout), lambda i: (0, 0)),
            pl.BlockSpec((1, Cout), lambda i: (0, 0)),
        ],
        out_specs=pl.BlockSpec((tm, Cout), lambda i: (i, 0)),
        compiler_params=pltpu.CompilerParams(dimension_semantics=("parallel",)),
        cost_estimate=cost,
    )(x_tok, w_bf, b)
    return out[:N]


# -----------------------------------------------------------------------------
# Pallas kernel 2: fused prediction heads (last decoder layer only).
#   class_embed: Linear(hidden, num_classes + 1)              -> padded to C1p
#   bbox_embed : MLP(hidden, hidden, 4, 3) + sigmoid          -> padded to 128
# Class head and bbox layer-1 share one fused [D, C1p + H] matmul.
# -----------------------------------------------------------------------------
def _heads_kernel(hs_ref, wcat_ref, bcat_ref, w2_ref, b2_ref, w3_ref, b3_ref,
                  logits_ref, boxes_ref, *, c1pad):
    h = hs_ref[...].astype(jnp.bfloat16)
    # fused [class | bbox-layer-1] matmul (wide N keeps the MXU occupied)
    y = jnp.dot(h, wcat_ref[...], preferred_element_type=jnp.float32) + bcat_ref[...]
    logits_ref[...] = y[:, :c1pad]
    x = jnp.maximum(y[:, c1pad:], 0.0).astype(jnp.bfloat16)
    x = jnp.maximum(
        jnp.dot(x, w2_ref[...], preferred_element_type=jnp.float32) + b2_ref[...],
        0.0,
    ).astype(jnp.bfloat16)
    x = jnp.dot(x, w3_ref[...], preferred_element_type=jnp.float32) + b3_ref[...]
    boxes_ref[...] = jax.nn.sigmoid(x)            # padded cols = 0.5, sliced outside


def heads_pallas(hs_flat, p, *, tm=256):
    """hs_flat: [M, D] f32 -> (logits [M, num_classes+1], boxes [M, 4])."""
    M, D = hs_flat.shape
    C1 = p["class_w"].shape[1]                    # num_classes + 1
    H = p["bbox_w1"].shape[1]                     # hidden
    C1p = _round_up(C1, 128)                      # lane-dense class output
    BOXP = 128                                    # lane-dense box output

    # fused + padded weights (bf16 operands for the MXU, f32 biases)
    wc_pad = jnp.pad(p["class_w"], ((0, 0), (0, C1p - C1)))
    bc_pad = jnp.pad(p["class_b"], ((0, 0), (0, C1p - C1)))
    wcat = jnp.concatenate([wc_pad, p["bbox_w1"]], axis=1).astype(jnp.bfloat16)
    bcat = jnp.concatenate([bc_pad, p["bbox_b1"]], axis=1)
    w2 = p["bbox_w2"].astype(jnp.bfloat16)
    b2 = p["bbox_b2"]
    w3 = jnp.pad(p["bbox_w3"], ((0, 0), (0, BOXP - 4))).astype(jnp.bfloat16)
    b3 = jnp.pad(p["bbox_b3"], ((0, 0), (0, BOXP - 4)))

    # pad token dim to a multiple of the (8-aligned) row tile
    Mpad = _round_up(M, 8)
    tm = min(tm, Mpad)
    Mpad = _round_up(Mpad, tm)
    hs = jnp.pad(hs_flat, ((0, Mpad - M), (0, 0))) if Mpad != M else hs_flat

    def full(arr):
        nd = arr.ndim
        return pl.BlockSpec(arr.shape, lambda i, _nd=nd: (0,) * _nd)

    flops = 2 * Mpad * D * (C1p + H) + 2 * Mpad * H * H + 2 * Mpad * H * BOXP
    cost = pl.CostEstimate(
        flops=flops,
        transcendentals=Mpad * BOXP,
        bytes_accessed=(Mpad * D * 4
                        + (D * (C1p + H) + H * H + H * BOXP) * 2
                        + Mpad * (C1p + BOXP) * 4),
    )

    logits, boxes = pl.pallas_call(
        functools.partial(_heads_kernel, c1pad=C1p),
        out_shape=(
            jax.ShapeDtypeStruct((Mpad, C1p), jnp.float32),
            jax.ShapeDtypeStruct((Mpad, BOXP), jnp.float32),
        ),
        grid=(Mpad // tm,),
        in_specs=[
            pl.BlockSpec((tm, D), lambda i: (i, 0)),
            full(wcat), full(bcat), full(w2), full(b2), full(w3), full(b3),
        ],
        out_specs=[
            pl.BlockSpec((tm, C1p), lambda i: (i, 0)),
            pl.BlockSpec((tm, BOXP), lambda i: (i, 0)),
        ],
        compiler_params=pltpu.CompilerParams(dimension_semantics=("parallel",)),
        cost_estimate=cost,
    )(hs, wcat, bcat, w2, b2, w3, b3)

    return logits[:M, :C1], boxes[:M, :4]


# -----------------------------------------------------------------------------
# Plain-JAX glue for external submodules (backbone / transformer) that are
# constructor arguments of DETR and not defined in models/detr.py.
# -----------------------------------------------------------------------------
def sine_positional_encoding(B, hidden, H, W):
    d = hidden // 2
    dim_t = 10000.0 ** (2.0 * (jnp.arange(d) // 2) / d)
    y = jnp.arange(H, dtype=jnp.float32)[:, None] / dim_t   # [H, d]
    x = jnp.arange(W, dtype=jnp.float32)[:, None] / dim_t   # [W, d]
    even = (jnp.arange(d) % 2) == 0
    pos_y = jnp.where(even, jnp.sin(y), jnp.cos(y))
    pos_x = jnp.where(even, jnp.sin(x), jnp.cos(x))
    pos = jnp.concatenate(
        [jnp.broadcast_to(pos_y[:, None, :], (H, W, d)),
         jnp.broadcast_to(pos_x[None, :, :], (H, W, d))], axis=-1)  # [H, W, hidden]
    pos = jnp.transpose(pos, (2, 0, 1))[None]                        # [1, hidden, H, W]
    return jnp.broadcast_to(pos, (B, hidden, H, W)).astype(jnp.float32)


def backbone_standin(samples, p, num_channels, hidden):
    # TODO(synk): real DETR uses a ResNet backbone (backbone.py); this is a
    # deterministic stand-in producing features/mask/pos of the right shapes.
    B, C, H, W = samples.shape
    x = jnp.einsum("bchw,cd->bdhw", samples, p["bb_w"]) + p["bb_b"][None, :, None, None]
    x = jax.nn.relu(x)
    Hf, Wf = H // 2, W // 2
    x = x.reshape(B, num_channels, Hf, 2, Wf, 2).mean(axis=(3, 5))   # stride-2 pool
    mask = jnp.zeros((B, Hf, Wf), dtype=bool)                        # no padding
    pos = sine_positional_encoding(B, hidden, Hf, Wf)
    return x, mask, pos


def transformer_standin(src_tok, mask_flat, query_embed, pos_tok, num_dec_layers):
    # TODO(synk): real DETR transformer (transformer.py) is an external
    # submodule; deterministic cross-attention stand-in, operating directly on
    # token-major [B, HW, D] memory (no NCHW round trip).
    B, HW, D = src_tok.shape
    mem = src_tok + pos_tok                                           # [B, HW, D]
    q = jnp.broadcast_to(query_embed[None], (B,) + query_embed.shape) # [B, Q, D]
    tgt = jnp.zeros_like(q)
    hs = []
    scale = 1.0 / jnp.sqrt(jnp.float32(D))
    key_mask = mask_flat[:, None, :]                                  # [B, 1, HW]
    for _ in range(num_dec_layers):
        attn_logits = jnp.einsum("bqd,bkd->bqk", tgt + q, mem) * scale
        attn_logits = jnp.where(key_mask, -1e9, attn_logits)
        attn = jax.nn.softmax(attn_logits, axis=-1)
        tgt = tgt + jnp.einsum("bqk,bkd->bqd", attn, mem)
        hs.append(tgt)
    return jnp.stack(hs, axis=0)                                      # [L, B, Q, D]


# -----------------------------------------------------------------------------
# DETR forward (aux_loss=False)
# -----------------------------------------------------------------------------
def detr_forward(samples, params, *, num_channels, hidden, num_dec_layers):
    # backbone
    src, mask, pos = backbone_standin(samples, params, num_channels, hidden)
    B, Cin, Hf, Wf = src.shape
    HW = Hf * Wf

    # single transpose into token-major layout; stay token-major afterwards
    x_tok = jnp.transpose(src, (0, 2, 3, 1)).reshape(B * HW, Cin)
    proj_tok = input_proj_pallas(x_tok, params["proj_w"], params["proj_b"])
    src_tok = proj_tok.reshape(B, HW, hidden)
    pos_tok = jnp.transpose(pos, (0, 2, 3, 1)).reshape(B, HW, hidden)
    mask_flat = mask.reshape(B, HW)

    # transformer (external submodule stand-in)
    hs = transformer_standin(src_tok, mask_flat, params["query_embed"], pos_tok,
                             num_dec_layers)                          # [L, B, Q, D]
    _, _, Q, D = hs.shape

    # aux_loss=False: only the last decoder layer feeds the heads
    hs_last = hs[-1].reshape(B * Q, D)
    logits_flat, boxes_flat = heads_pallas(hs_last, params)
    pred_logits = logits_flat.reshape(B, Q, -1)
    pred_boxes = boxes_flat.reshape(B, Q, 4)

    return {"pred_logits": pred_logits, "pred_boxes": pred_boxes}


# -----------------------------------------------------------------------------
# Deterministic parameter initialization (synthetic weights).
# -----------------------------------------------------------------------------
def init_params(key, *, img_channels, num_channels, hidden, num_classes,
                num_queries):
    ks = jax.random.split(key, 16)
    s = 0.1
    n = lambda k, shape: (jax.random.normal(k, shape, jnp.float32) * s)
    p = {
        # backbone stand-in
        "bb_w": n(ks[0], (img_channels, num_channels)),
        "bb_b": n(ks[1], (num_channels,)),
        # input_proj 1x1 conv, stored as [Cin, Cout]
        "proj_w": n(ks[2], (num_channels, hidden)),
        "proj_b": n(ks[3], (1, hidden)),
        # query embedding
        "query_embed": n(ks[4], (num_queries, hidden)),
        # class_embed Linear(hidden, num_classes + 1), stored [in, out]
        "class_w": n(ks[5], (hidden, num_classes + 1)),
        "class_b": n(ks[6], (1, num_classes + 1)),
        # bbox_embed MLP(hidden, hidden, 4, 3), stored [in, out]
        "bbox_w1": n(ks[7], (hidden, hidden)),
        "bbox_b1": n(ks[8], (1, hidden)),
        "bbox_w2": n(ks[9], (hidden, hidden)),
        "bbox_b2": n(ks[10], (1, hidden)),
        "bbox_w3": n(ks[11], (hidden, 4)),
        "bbox_b3": n(ks[12], (1, 4)),
    }
    return p


if __name__ == "__main__":
    B = 2
    IMG_C, H_IMG, W_IMG = 3, 16, 16      # samples.tensor: [B, 3, H, W]
    NUM_CHANNELS = 4                     # backbone.num_channels
    HIDDEN = 32                          # transformer.d_model
    NUM_QUERIES = 8
    NUM_CLASSES = 5
    NUM_DEC_LAYERS = 2

    key = jax.random.PRNGKey(0)
    k_params, k_data = jax.random.split(key)
    params = init_params(k_params, img_channels=IMG_C, num_channels=NUM_CHANNELS,
                         hidden=HIDDEN, num_classes=NUM_CLASSES,
                         num_queries=NUM_QUERIES)
    samples = jax.random.normal(k_data, (B, IMG_C, H_IMG, W_IMG), jnp.float32)

    fwd = jax.jit(functools.partial(detr_forward, num_channels=NUM_CHANNELS,
                                    hidden=HIDDEN,
                                    num_dec_layers=NUM_DEC_LAYERS))
    out = fwd(samples, params)
    jax.block_until_ready(out)

    assert out["pred_logits"].shape == (B, NUM_QUERIES, NUM_CLASSES + 1)
    assert out["pred_boxes"].shape == (B, NUM_QUERIES, 4)
    assert bool(jnp.all((out["pred_boxes"] >= 0.0) & (out["pred_boxes"] <= 1.0)))
    print("KERNEL_OK")
</pallas_src>

<mosaic_0001>
module attributes {stable_mosaic.version = 11 : i64} {
  func.func @_input_proj_kernel(%arg0: i32, %arg1: memref<128x4xf32, #tpu.memory_space<vmem>>, %arg2: memref<4x32xbf16, #tpu.memory_space<vmem>>, %arg3: memref<1x32xf32, #tpu.memory_space<vmem>>, %arg4: memref<128x32xf32, #tpu.memory_space<vmem>>) attributes {dimension_semantics = [#tpu.dimension_semantics<parallel>], iteration_bounds = array<i64: 1>, scalar_prefetch = 0 : i64, scratch_operands = 0 : i64, tpu.core_type = #tpu.core_type<tc>, window_params = [{transform_indices = @transform_0, window_bounds = array<i64: 128, 4>}, {pipeline_mode = #tpu.pipeline_mode<synchronous>, transform_indices = @transform_1, window_bounds = array<i64: 4, 32>}, {pipeline_mode = #tpu.pipeline_mode<synchronous>, transform_indices = @transform_2, window_bounds = array<i64: 1, 32>}, {transform_indices = @transform_3, window_bounds = array<i64: 128, 32>}]} {
    %c0 = arith.constant 0 : index
    %c0_0 = arith.constant 0 : index
    %0 = vector.load %arg1[%c0, %c0_0] : memref<128x4xf32, #tpu.memory_space<vmem>>, vector<128x4xf32>
    %1 = arith.truncf %0 : vector<128x4xf32> to vector<128x4xbf16>
    %c0_1 = arith.constant 0 : index
    %c0_2 = arith.constant 0 : index
    %2 = vector.load %arg2[%c0_1, %c0_2] : memref<4x32xbf16, #tpu.memory_space<vmem>>, vector<4x32xbf16>
    %cst = arith.constant dense<0.000000e+00> : vector<128x32xf32>
    %3 = tpu.matmul %1, %2, %cst {dimension_numbers = #tpu.dot_dimension_numbers<[1], [0], [0], [1], [0, 0, 1, 1], [], []>} : vector<128x4xbf16>, vector<4x32xbf16>, vector<128x32xf32> -> vector<128x32xf32>
    %c0_3 = arith.constant 0 : index
    %c0_4 = arith.constant 0 : index
    %4 = vector.load %arg3[%c0_3, %c0_4] : memref<1x32xf32, #tpu.memory_space<vmem>>, vector<1x32xf32>
    %5 = vector.broadcast %4 : vector<1x32xf32> to vector<128x32xf32>
    %6 = arith.addf %3, %5 : vector<128x32xf32>
    %c0_5 = arith.constant 0 : index
    %c0_6 = arith.constant 0 : index
    %7 = vector.load %arg4[%c0_5, %c0_6] : memref<128x32xf32, #tpu.memory_space<vmem>>, vector<128x32xf32>
    tpu.vector_store %arg4[%c0_5, %c0_6], %6 {strides = array<i32>} : memref<128x32xf32, #tpu.memory_space<vmem>>, vector<128x32xf32>,
    return
  }
  func.func @transform_0(%arg0: i32) -> (i32, i32) {
    %c0_i32 = arith.constant 0 : i32
    %c0_i32_0 = arith.constant 0 : i32
    return %arg0, %c0_i32 : i32, i32
  }
  func.func @transform_1(%arg0: i32) -> (i32, i32) {
    %c0_i32 = arith.constant 0 : i32
    %c0_i32_0 = arith.constant 0 : i32
    %c0_i32_1 = arith.constant 0 : i32
    return %c0_i32, %c0_i32_0 : i32, i32
  }
  func.func @transform_2(%arg0: i32) -> (i32, i32) {
    %c0_i32 = arith.constant 0 : i32
    %c0_i32_0 = arith.constant 0 : i32
    %c0_i32_1 = arith.constant 0 : i32
    return %c0_i32, %c0_i32_0 : i32, i32
  }
  func.func @transform_3(%arg0: i32) -> (i32, i32) {
    %c0_i32 = arith.constant 0 : i32
    %c0_i32_0 = arith.constant 0 : i32
    return %arg0, %c0_i32 : i32, i32
  }
}

module attributes {stable_mosaic.version = 11 : i64} {
  func.func @_heads_kernel(%arg0: i32, %arg1: memref<16x32xf32, #tpu.memory_space<vmem>>, %arg2: memref<32x160xbf16, #tpu.memory_space<vmem>>, %arg3: memref<1x160xf32, #tpu.memory_space<vmem>>, %arg4: memref<32x32xbf16, #tpu.memory_space<vmem>>, %arg5: memref<1x32xf32, #tpu.memory_space<vmem>>, %arg6: memref<32x128xbf16, #tpu.memory_space<vmem>>, %arg7: memref<1x128xf32, #tpu.memory_space<vmem>>, %arg8: memref<16x128xf32, #tpu.memory_space<vmem>>, %arg9: memref<16x128xf32, #tpu.memory_space<vmem>>) attributes {dimension_semantics = [#tpu.dimension_semantics<parallel>], iteration_bounds = array<i64: 1>, scalar_prefetch = 0 : i64, scratch_operands = 0 : i64, tpu.core_type = #tpu.core_type<tc>, window_params = [{transform_indices = @transform_0, window_bounds = array<i64: 16, 32>}, {pipeline_mode = #tpu.pipeline_mode<synchronous>, transform_indices = @transform_1, window_bounds = array<i64: 32, 160>}, {pipeline_mode = #tpu.pipeline_mode<synchronous>, transform_indices = @transform_2, window_bounds = array<i64: 1, 160>}, {pipeline_mode = #tpu.pipeline_mode<synchronous>, transform_indices = @transform_3, window_bounds = array<i64: 32, 32>}, {pipeline_mode = #tpu.pipeline_mode<synchronous>, transform_indices = @transform_4, window_bounds = array<i64: 1, 32>}, {pipeline_mode = #tpu.pipeline_mode<synchronous>, transform_indices = @transform_5, window_bounds = array<i64: 32, 128>}, {pipeline_mode = #tpu.pipeline_mode<synchronous>, transform_indices = @transform_6, window_bounds = array<i64: 1, 128>}, {transform_indices = @transform_7, window_bounds = array<i64: 16, 128>}, {transform_indices = @transform_8, window_bounds = array<i64: 16, 128>}]} {
    %c0 = arith.constant 0 : index
    %c0_0 = arith.constant 0 : index
    %0 = vector.load %arg1[%c0, %c0_0] : memref<16x32xf32, #tpu.memory_space<vmem>>, vector<16x32xf32>
    %1 = arith.truncf %0 : vector<16x32xf32> to vector<16x32xbf16>
    %c0_1 = arith.constant 0 : index
    %c0_2 = arith.constant 0 : index
    %2 = vector.load %arg2[%c0_1, %c0_2] : memref<32x160xbf16, #tpu.memory_space<vmem>>, vector<32x160xbf16>
    %cst = arith.constant dense<0.000000e+00> : vector<16x160xf32>
    %3 = tpu.matmul %1, %2, %cst {dimension_numbers = #tpu.dot_dimension_numbers<[1], [0], [0], [1], [0, 0, 1, 1], [], []>} : vector<16x32xbf16>, vector<32x160xbf16>, vector<16x160xf32> -> vector<16x160xf32>
    %c0_3 = arith.constant 0 : index
    %c0_4 = arith.constant 0 : index
    %4 = vector.load %arg3[%c0_3, %c0_4] : memref<1x160xf32, #tpu.memory_space<vmem>>, vector<1x160xf32>
    %5 = vector.broadcast %4 : vector<1x160xf32> to vector<16x160xf32>
    %6 = arith.addf %3, %5 : vector<16x160xf32>
    %7 = vector.extract_strided_slice %6 {offsets = [0, 0], sizes = [16, 128], strides = [1, 1]} : vector<16x160xf32> to vector<16x128xf32>
    %c0_5 = arith.constant 0 : index
    %c0_6 = arith.constant 0 : index
    %8 = vector.load %arg8[%c0_5, %c0_6] : memref<16x128xf32, #tpu.memory_space<vmem>>, vector<16x128xf32>
    tpu.vector_store %arg8[%c0_5, %c0_6], %7 {strides = array<i32>} : memref<16x128xf32, #tpu.memory_space<vmem>>, vector<16x128xf32>,
    %9 = vector.extract_strided_slice %6 {offsets = [0, 128], sizes = [16, 32], strides = [1, 1]} : vector<16x160xf32> to vector<16x32xf32>
    %cst_7 = arith.constant 0.000000e+00 : f32
    %10 = vector.broadcast %cst_7 : f32 to vector<16x32xf32>
    %11 = arith.maximumf %9, %10 : vector<16x32xf32>
    %12 = arith.truncf %11 : vector<16x32xf32> to vector<16x32xbf16>
    %c0_8 = arith.constant 0 : index
    %c0_9 = arith.constant 0 : index
    %13 = vector.load %arg4[%c0_8, %c0_9] : memref<32x32xbf16, #tpu.memory_space<vmem>>, vector<32x32xbf16>
    %cst_10 = arith.constant dense<0.000000e+00> : vector<16x32xf32>
    %14 = tpu.matmul %12, %13, %cst_10 {dimension_numbers = #tpu.dot_dimension_numbers<[1], [0], [0], [1], [0, 0, 1, 1], [], []>} : vector<16x32xbf16>, vector<32x32xbf16>, vector<16x32xf32> -> vector<16x32xf32>
    %c0_11 = arith.constant 0 : index
    %c0_12 = arith.constant 0 : index
    %15 = vector.load %arg5[%c0_11, %c0_12] : memref<1x32xf32, #tpu.memory_space<vmem>>, vector<1x32xf32>
    %16 = vector.broadcast %15 : vector<1x32xf32> to vector<16x32xf32>
    %17 = arith.addf %14, %16 : vector<16x32xf32>
    %cst_13 = arith.constant 0.000000e+00 : f32
    %18 = vector.broadcast %cst_13 : f32 to vector<16x32xf32>
    %19 = arith.maximumf %17, %18 : vector<16x32xf32>
    %20 = arith.truncf %19 : vector<16x32xf32> to vector<16x32xbf16>
    %c0_14 = arith.constant 0 : index
    %c0_15 = arith.constant 0 : index
    %21 = vector.load %arg6[%c0_14, %c0_15] : memref<32x128xbf16, #tpu.memory_space<vmem>>, vector<32x128xbf16>
    %cst_16 = arith.constant dense<0.000000e+00> : vector<16x128xf32>
    %22 = tpu.matmul %20, %21, %cst_16 {dimension_numbers = #tpu.dot_dimension_numbers<[1], [0], [0], [1], [0, 0, 1, 1], [], []>} : vector<16x32xbf16>, vector<32x128xbf16>, vector<16x128xf32> -> vector<16x128xf32>
    %c0_17 = arith.constant 0 : index
    %c0_18 = arith.constant 0 : index
    %23 = vector.load %arg7[%c0_17, %c0_18] : memref<1x128xf32, #tpu.memory_space<vmem>>, vector<1x128xf32>
    %24 = vector.broadcast %23 : vector<1x128xf32> to vector<16x128xf32>
    %25 = arith.addf %22, %24 : vector<16x128xf32>
    %26 = arith.negf %25 : vector<16x128xf32>
    %27 = math.exp %26 : vector<16x128xf32>
    %cst_19 = arith.constant 1.000000e+00 : f32
    %28 = vector.broadcast %cst_19 : f32 to vector<16x128xf32>
    %29 = arith.addf %28, %27 : vector<16x128xf32>
    %30 = arith.divf %28, %29 : vector<16x128xf32>
    %c0_20 = arith.constant 0 : index
    %c0_21 = arith.constant 0 : index
    %31 = vector.load %arg9[%c0_20, %c0_21] : memref<16x128xf32, #tpu.memory_space<vmem>>, vector<16x128xf32>
    tpu.vector_store %arg9[%c0_20, %c0_21], %30 {strides = array<i32>} : memref<16x128xf32, #tpu.memory_space<vmem>>, vector<16x128xf32>,
    return
  }
  func.func @transform_0(%arg0: i32) -> (i32, i32) {
    %c0_i32 = arith.constant 0 : i32
    %c0_i32_0 = arith.constant 0 : i32
    return %arg0, %c0_i32 : i32, i32
  }
  func.func @transform_1(%arg0: i32) -> (i32, i32) {
    %c0_i32 = arith.constant 0 : i32
    %c0_i32_0 = arith.constant 0 : i32
    %c0_i32_1 = arith.constant 0 : i32
    return %c0_i32, %c0_i32_0 : i32, i32
  }
  func.func @transform_2(%arg0: i32) -> (i32, i32) {
    %c0_i32 = arith.constant 0 : i32
    %c0_i32_0 = arith.constant 0 : i32
    %c0_i32_1 = arith.constant 0 : i32
    return %c0_i32, %c0_i32_0 : i32, i32
  }
  func.func @transform_3(%arg0: i32) -> (i32, i32) {
    %c0_i32 = arith.constant 0 : i32
    %c0_i32_0 = arith.constant 0 : i32
    %c0_i32_1 = arith.constant 0 : i32
    return %c0_i32, %c0_i32_0 : i32, i32
  }
  func.func @transform_4(%arg0: i32) -> (i32, i32) {
    %c0_i32 = arith.constant 0 : i32
    %c0_i32_0 = arith.constant 0 : i32
    %c0_i32_1 = arith.constant 0 : i32
    return %c0_i32, %c0_i32_0 : i32, i32
  }
  func.func @transform_5(%arg0: i32) -> (i32, i32) {
    %c0_i32 = arith.constant 0 : i32
    %c0_i32_0 = arith.constant 0 : i32
    %c0_i32_1 = arith.constant 0 : i32
    return %c0_i32, %c0_i32_0 : i32, i32
  }
  func.func @transform_6(%arg0: i32) -> (i32, i32) {
    %c0_i32 = arith.constant 0 : i32
    %c0_i32_0 = arith.constant 0 : i32
    %c0_i32_1 = arith.constant 0 : i32
    return %c0_i32, %c0_i32_0 : i32, i32
  }
  func.func @transform_7(%arg0: i32) -> (i32, i32) {
    %c0_i32 = arith.constant 0 : i32
    %c0_i32_0 = arith.constant 0 : i32
    return %arg0, %c0_i32 : i32, i32
  }
  func.func @transform_8(%arg0: i32) -> (i32, i32) {
    %c0_i32 = arith.constant 0 : i32
    %c0_i32_0 = arith.constant 0 : i32
    return %arg0, %c0_i32 : i32, i32
  }
}

</mosaic_0001>

<llo_original>
// kernel: detr_forward.2
$region0: #{detr_forward.2}
  #allocation0 [shape = 'u32[]', space=smem, size = 0x4, offset = 0x4, fixed_abs, tag = 'smem constant byte address 0x4 - core index']
  #allocation1 [shape = 'u32[144,128]{1,0:T(1,128)}', space=vmem, size = 0x12000, scoped, tag = 'internal scratch']
  %s0 = inlined_call_operand.vmem [shape: f32[128,4], index: 0, kind: input, shape index: {}]
  %s1 = inlined_call_operand.vmem [shape: bf16[4,32], index: 1, kind: input, shape index: {}]
  %s2 = inlined_call_operand.vmem [shape: f32[1,32], index: 2, kind: input, shape index: {}]
  %s3 = inlined_call_operand.vmem [shape: f32[128,32], index: 3, kind: output, shape index: {}]
  %s4 = sld [smem:[#allocation0]]
  $region22: #{detr_forward.2} parent=0
    _
  %s6 = ssub.s32 1, %s4
  %s7 = scalar_select 0, %s6, %s4
  // Predicated region
  $region2: #{detr_forward.2} parent=0 // pred_check
    _
  $region3: #{detr_forward.2} parent=0 // pred_check_branch
    %9 = sbr.rel (0) target = $region5
  $region4: #{detr_forward.2} parent=0 // pred_region
    _
  $region5: #{detr_forward.2} parent=0 // pred_fallthru
    _
  // Predicated region
  $region6: #{detr_forward.2} parent=0 // pred_check
    _
  $region7: #{detr_forward.2} parent=0 // pred_check_branch
    %11 = sbr.rel (0) target = $region9
  $region8: #{detr_forward.2} parent=0 // pred_region
    _
  $region9: #{detr_forward.2} parent=0 // pred_fallthru
    _
  // Predicated region
  $region10: #{detr_forward.2} parent=0 // pred_check
    _
  $region11: #{detr_forward.2} parent=0 // pred_check_branch
    %13 = sbr.rel (0) target = $region13
  $region12: #{detr_forward.2} parent=0 // pred_region
    _
  $region13: #{detr_forward.2} parent=0 // pred_fallthru
    _
  %v15 = vld [vmem:[%s0] sm:$0xff]
  %v16 = vld [vmem:[%s0 + $0x8] sm:$0xff]
  %v17 = vld [vmem:[%s0 + $0x10] sm:$0xff]
  %v18 = vld [vmem:[%s0 + $0x18] sm:$0xff]
  %v19 = vld [vmem:[%s0 + $0x20] sm:$0xff]
  %v20 = vld [vmem:[%s0 + $0x28] sm:$0xff]
  %v21 = vld [vmem:[%s0 + $0x30] sm:$0xff]
  %v22 = vld [vmem:[%s0 + $0x38] sm:$0xff]
  %v23 = vld [vmem:[%s0 + $0x40] sm:$0xff]
  %v24 = vld [vmem:[%s0 + $0x48] sm:$0xff]
  %v25 = vld [vmem:[%s0 + $0x50] sm:$0xff]
  %v26 = vld [vmem:[%s0 + $0x58] sm:$0xff]
  %v27 = vld [vmem:[%s0 + $0x60] sm:$0xff]
  %v28 = vld [vmem:[%s0 + $0x68] sm:$0xff]
  %v29 = vld [vmem:[%s0 + $0x70] sm:$0xff]
  %v30 = vld [vmem:[%s0 + $0x78] sm:$0xff]
  %v31 = vpack.c.bf16 %v16, %v15
  %v32 = vpack.c.bf16 %v18, %v17
  %v33 = vpack.c.bf16 %v20, %v19
  %v34 = vpack.c.bf16 %v22, %v21
  %v35 = vpack.c.bf16 %v24, %v23
  %v36 = vpack.c.bf16 %v26, %v25
  %v37 = vpack.c.bf16 %v28, %v27
  %v38 = vpack.c.bf16 %v30, %v29
  %v39 = vld [vmem:[%s1] sm:$0x3]
  %v40 = vld [vmem:[%s2] sm:$0x1]
  %v42 = vlaneseq
  %v43 = vshrl.u32 %v42, 7
  %v44 = vsub.s32 0, %v43
  %v45 = vrot.slane %v40, %v44
  %vm47 = vcmask 31744
  %v49 = vsel %vm47, %v31, 0
  %v52 = vsel %vm47, %v32, 0
  %v55 = vsel %vm47, %v33, 0
  %v58 = vsel %vm47, %v34, 0
  %v61 = vsel %vm47, %v35, 0
  %v64 = vsel %vm47, %v36, 0
  %v67 = vsel %vm47, %v37, 0
  %v70 = vsel %vm47, %v38, 0
  %vm72 = vcmask 1041408
  %v74 = vsel %vm72, %v39, 0
  %76 = vmatprep.subr.bf16.mxu0 0
  %77 = vmatpush1.bf16.msra.mxu0 %v74
  %78 = vmatprep.subr.bf16.mxu0 0
  %79 = vmatpush1.bf16.msra.mxu0 0
  %80 = vmatprep.subr.bf16.mxu0 0
  %81 = vmatpush1.bf16.msra.mxu0 0
  %82 = vmatprep.subr.bf16.mxu0 0
  %83 = vmatpush1.bf16.msra.mxu0 0
  %84 = vmatprep.subr.bf16.mxu0 0
  %85 = vmatpush1.bf16.msra.mxu0 0
  %86 = vmatprep.subr.bf16.mxu0 0
  %87 = vmatpush1.bf16.msra.mxu0 0
  %88 = vmatprep.subr.bf16.mxu0 0
  %89 = vmatpush1.bf16.msra.mxu0 0
  %90 = vmatprep.subr.bf16.mxu0 0
  %91 = vmatpush1.bf16.msra.mxu0 0
  %92 = vmatprep.subr.bf16.mxu0 0
  %93 = vmatpush1.bf16.msra.mxu0 0
  %94 = vmatprep.subr.bf16.mxu0 0
  %95 = vmatpush1.bf16.msra.mxu0 0
  %96 = vmatprep.subr.bf16.mxu0 0
  %97 = vmatpush1.bf16.msra.mxu0 0
  %98 = vmatprep.subr.bf16.mxu0 0
  %99 = vmatpush1.bf16.msra.mxu0 0
  %100 = vmatprep.subr.bf16.mxu0 0
  %101 = vmatpush1.bf16.msra.mxu0 0
  %102 = vmatprep.subr.bf16.mxu0 0
  %103 = vmatpush1.bf16.msra.mxu0 0
  %104 = vmatprep.subr.bf16.mxu0 0
  %105 = vmatpush1.bf16.msra.mxu0 0
  %106 = vmatprep.subr.bf16.mxu0 0
  %107 = vmatpush1.bf16.msra.mxu0 0
  %108 = vmatprep.mubr.bf16.mxu0 0
  %109 = vmatmul.mubr.bf16.gmra.mrb[0].mxu0 %v49
  %v110 = vpop.f32.mrb[0].mxu0
  %v111 = vadd.f32 %v45, %v110
  %v112 = vpop.f32.mrb[0].mxu0
  %v113 = vpop.f32.mrb[0].mxu0
  %v114 = vadd.f32 %v45, %v113
  %v115 = vpop.f32.mrb[0].mxu0
  %116 = vmatprep.mubr.bf16.mxu0 0
  %117 = vmatmul.mubr.bf16.gmra.mrb[0].mxu0 %v52
  %v118 = vpop.f32.mrb[0].mxu0
  %v119 = vadd.f32 %v45, %v118
  %v120 = vpop.f32.mrb[0].mxu0
  %v121 = vpop.f32.mrb[0].mxu0
  %v122 = vadd.f32 %v45, %v121
  %v123 = vpop.f32.mrb[0].mxu0
  %124 = vmatprep.mubr.bf16.mxu0 0
  %125 = vmatmul.mubr.bf16.gmra.mrb[0].mxu0 %v55
  %v126 = vpop.f32.mrb[0].mxu0
  %v127 = vadd.f32 %v45, %v126
  %v128 = vpop.f32.mrb[0].mxu0
  %v129 = vpop.f32.mrb[0].mxu0
  %v130 = vadd.f32 %v45, %v129
  %v131 = vpop.f32.mrb[0].mxu0
  %132 = vmatprep.mubr.bf16.mxu0 0
  %133 = vmatmul.mubr.bf16.gmra.mrb[0].mxu0 %v58
  %v134 = vpop.f32.mrb[0].mxu0
  %v135 = vadd.f32 %v45, %v134
  %v136 = vpop.f32.mrb[0].mxu0
  %v137 = vpop.f32.mrb[0].mxu0
  %v138 = vadd.f32 %v45, %v137
  %v139 = vpop.f32.mrb[0].mxu0
  %140 = vmatprep.mubr.bf16.mxu0 0
  %141 = vmatmul.mubr.bf16.gmra.mrb[0].mxu0 %v61
  %v142 = vpop.f32.mrb[0].mxu0
  %v143 = vadd.f32 %v45, %v142
  %v144 = vpop.f32.mrb[0].mxu0
  %v145 = vpop.f32.mrb[0].mxu0
  %v146 = vadd.f32 %v45, %v145
  %v147 = vpop.f32.mrb[0].mxu0
  %148 = vmatprep.mubr.bf16.mxu0 0
  %149 = vmatmul.mubr.bf16.gmra.mrb[0].mxu0 %v64
  %v150 = vpop.f32.mrb[0].mxu0
  %v151 = vadd.f32 %v45, %v150
  %v152 = vpop.f32.mrb[0].mxu0
  %v153 = vpop.f32.mrb[0].mxu0
  %v154 = vadd.f32 %v45, %v153
  %v155 = vpop.f32.mrb[0].mxu0
  %156 = vmatprep.mubr.bf16.mxu0 0
  %157 = vmatmul.mubr.bf16.gmra.mrb[0].mxu0 %v67
  %v158 = vpop.f32.mrb[0].mxu0
  %v159 = vadd.f32 %v45, %v158
  %v160 = vpop.f32.mrb[0].mxu0
  %v161 = vpop.f32.mrb[0].mxu0
  %v162 = vadd.f32 %v45, %v161
  %v163 = vpop.f32.mrb[0].mxu0
  %164 = vmatprep.mubr.bf16.mxu0 0
  %165 = vmatmul.mubr.bf16.gmra.mrb[0].mxu0 %v70
  %v166 = vpop.f32.mrb[0].mxu0
  %v167 = vadd.f32 %v45, %v166
  %v168 = vpop.f32.mrb[0].mxu0
  %v169 = vpop.f32.mrb[0].mxu0
  %v170 = vadd.f32 %v45, %v169
  %v171 = vpop.f32.mrb[0].mxu0
  %172 = vdwg.mxu0
  %vm173 = vcmask 261120
  %174 = vst.msk [vmem:[%s3] sm:$0xff] %vm173, %v111
  %175 = vst.msk [vmem:[%s3 + $0x8] sm:$0xff] %vm173, %v114
  %176 = vst.msk [vmem:[%s3 + $0x10] sm:$0xff] %vm173, %v119
  %177 = vst.msk [vmem:[%s3 + $0x18] sm:$0xff] %vm173, %v122
  %178 = vst.msk [vmem:[%s3 + $0x20] sm:$0xff] %vm173, %v127
  %179 = vst.msk [vmem:[%s3 + $0x28] sm:$0xff] %vm173, %v130
  %180 = vst.msk [vmem:[%s3 + $0x30] sm:$0xff] %vm173, %v135
  %181 = vst.msk [vmem:[%s3 + $0x38] sm:$0xff] %vm173, %v138
  %182 = vst.msk [vmem:[%s3 + $0x40] sm:$0xff] %vm173, %v143
  %183 = vst.msk [vmem:[%s3 + $0x48] sm:$0xff] %vm173, %v146
  %184 = vst.msk [vmem:[%s3 + $0x50] sm:$0xff] %vm173, %v151
  %185 = vst.msk [vmem:[%s3 + $0x58] sm:$0xff] %vm173, %v154
  %186 = vst.msk [vmem:[%s3 + $0x60] sm:$0xff] %vm173, %v159
  %187 = vst.msk [vmem:[%s3 + $0x68] sm:$0xff] %vm173, %v162
  %188 = vst.msk [vmem:[%s3 + $0x70] sm:$0xff] %vm173, %v167
  %189 = vst.msk [vmem:[%s3 + $0x78] sm:$0xff] %vm173, %v170
  // Predicated region
  $region14: #{detr_forward.2} parent=0 // pred_check
    _
  $region15: #{detr_forward.2} parent=0 // pred_check_branch
    %191 = sbr.rel (0) target = $region17
  $region16: #{detr_forward.2} parent=0 // pred_region
    _
  $region17: #{detr_forward.2} parent=0 // pred_fallthru
    _
  // Predicated region
  $region18: #{detr_forward.2} parent=0 // pred_check
    _
  $region19: #{detr_forward.2} parent=0 // pred_check_branch
    %193 = sbr.rel (0) target = $region21
  $region20: #{detr_forward.2} parent=0 // pred_region
    _
  $region21: #{detr_forward.2} parent=0 // pred_fallthru
    _

// kernel: detr_forward.3
$region0: #{detr_forward.3}
  #allocation0 [shape = 'u32[]', space=smem, size = 0x4, offset = 0x4, fixed_abs, tag = 'smem constant byte address 0x4 - core index']
  #allocation1 [shape = 'u32[144,128]{1,0:T(1,128)}', space=vmem, size = 0x12000, scoped, tag = 'internal scratch']
  %s0 = inlined_call_operand.vmem [shape: f32[16,32], index: 0, kind: input, shape index: {}]
  %s1 = inlined_call_operand.vmem [shape: bf16[32,160], index: 1, kind: input, shape index: {}]
  %s2 = inlined_call_operand.vmem [shape: f32[1,160], index: 2, kind: input, shape index: {}]
  %s3 = inlined_call_operand.vmem [shape: bf16[32,32], index: 3, kind: input, shape index: {}]
  %s4 = inlined_call_operand.vmem [shape: f32[1,32], index: 4, kind: input, shape index: {}]
  %s5 = inlined_call_operand.vmem [shape: bf16[32,128], index: 5, kind: input, shape index: {}]
  %s6 = inlined_call_operand.vmem [shape: f32[1,128], index: 6, kind: input, shape index: {}]
  %s7 = inlined_call_operand.vmem [shape: f32[16,128], index: 7, kind: output, shape index: {0}]
  %s8 = inlined_call_operand.vmem [shape: f32[16,128], index: 8, kind: output, shape index: {1}]
  %9 = xla_tuple %s7, %s8
  %s10 = sld [smem:[#allocation0]]
  $region46: #{detr_forward.3} parent=0
    _
  %s12 = ssub.s32 1, %s10
  %s13 = scalar_select 0, %s12, %s10
  // Predicated region
  $region2: #{detr_forward.3} parent=0 // pred_check
    _
  $region3: #{detr_forward.3} parent=0 // pred_check_branch
    %15 = sbr.rel (0) target = $region5
  $region4: #{detr_forward.3} parent=0 // pred_region
    _
  $region5: #{detr_forward.3} parent=0 // pred_fallthru
    _
  // Predicated region
  $region6: #{detr_forward.3} parent=0 // pred_check
    _
  $region7: #{detr_forward.3} parent=0 // pred_check_branch
    %17 = sbr.rel (0) target = $region9
  $region8: #{detr_forward.3} parent=0 // pred_region
    _
  $region9: #{detr_forward.3} parent=0 // pred_fallthru
    _
  // Predicated region
  $region10: #{detr_forward.3} parent=0 // pred_check
    _
  $region11: #{detr_forward.3} parent=0 // pred_check_branch
    %19 = sbr.rel (0) target = $region13
  $region12: #{detr_forward.3} parent=0 // pred_region
    _
  $region13: #{detr_forward.3} parent=0 // pred_fallthru
    _
  // Predicated region
  $region14: #{detr_forward.3} parent=0 // pred_check
    _
  $region15: #{detr_forward.3} parent=0 // pred_check_branch
    %21 = sbr.rel (0) target = $region17
  $region16: #{detr_forward.3} parent=0 // pred_region
    _
  $region17: #{detr_forward.3} parent=0 // pred_fallthru
    _
  // Predicated region
  $region18: #{detr_forward.3} parent=0 // pred_check
    _
  $region19: #{detr_forward.3} parent=0 // pred_check_branch
    %23 = sbr.rel (0) target = $region21
  $region20: #{detr_forward.3} parent=0 // pred_region
    _
  $region21: #{detr_forward.3} parent=0 // pred_fallthru
    _
  // Predicated region
  $region22: #{detr_forward.3} parent=0 // pred_check
    _
  $region23: #{detr_forward.3} parent=0 // pred_check_branch
    %25 = sbr.rel (0) target = $region25
  $region24: #{detr_forward.3} parent=0 // pred_region
    _
  $region25: #{detr_forward.3} parent=0 // pred_fallthru
    _
  // Predicated region
  $region26: #{detr_forward.3} parent=0 // pred_check
    _
  $region27: #{detr_forward.3} parent=0 // pred_check_branch
    %27 = sbr.rel (0) target = $region29
  $region28: #{detr_forward.3} parent=0 // pred_region
    _
  $region29: #{detr_forward.3} parent=0 // pred_fallthru
    _
  %v29 = vld [vmem:[%s0] sm:$0xff]
  %v30 = vld [vmem:[%s0 + $0x8] sm:$0xff]
  %v31 = vpack.c.bf16 %v30, %v29
  %v32 = vld [vmem:[%s1] sm:$0xff]
  %v33 = vld [vmem:[%s1 + $0x8] sm:$0xff]
  %v34 = vld [vmem:[%s1 + $0x10] sm:$0xff]
  %v35 = vld [vmem:[%s1 + $0x18] sm:$0xff]
  %v36 = vld [vmem:[%s2] sm:$0x3]
  %v38 = vlaneseq
  %v39 = vshrl.u32 %v38, 7
  %v40 = vsub.s32 0, %v39
  %v41 = vrot.slane %v36, %v40
  %v42 = vlaneseq
  %v43 = vshrl.u32 %v42, 7
  %v44 = vsub.s32 1, %v43
  %v45 = vrot.slane %v36, %v44
  %v52 = vunpack.c.l.b16 %v32
  %v53 = vunpack.c.h.b16 %v32
  %v54 = vunpack.c.l.b16 %v33
  %v55 = vunpack.c.h.b16 %v33
  %v56 = vunpack.c.l.b16 %v34
  %v57 = vunpack.c.h.b16 %v34
  %v58 = vunpack.c.l.b16 %v35
  %v59 = vunpack.c.h.b16 %v35
  %v60 = vpack.c.b16 %v54, %v52
  %v61 = vpack.c.b16 %v55, %v53
  %v62 = vpack.c.b16 %v58, %v56
  %v63 = vpack.c.b16 %v59, %v57
  %vm68 = vcmask 261120
  %v70 = vsel %vm68, %v31, 0
  %72 = vmatprep.subr.bf16.mxu0 %v61
  %73 = vmatpush1.bf16.msra.mxu0 %v60
  %74 = vmatprep.subr.bf16.mxu0 %v63
  %75 = vmatpush1.bf16.msra.mxu0 %v62
  %76 = vmatprep.subr.bf16.mxu0 0
  %77 = vmatpush1.bf16.msra.mxu0 0
  %78 = vmatprep.subr.bf16.mxu0 0
  %79 = vmatpush1.bf16.msra.mxu0 0
  %80 = vmatprep.subr.bf16.mxu0 0
  %81 = vmatpush1.bf16.msra.mxu0 0
  %82 = vmatprep.subr.bf16.mxu0 0
  %83 = vmatpush1.bf16.msra.mxu0 0
  %84 = vmatprep.subr.bf16.mxu0 0
  %85 = vmatpush1.bf16.msra.mxu0 0
  %86 = vmatprep.subr.bf16.mxu0 0
  %87 = vmatpush1.bf16.msra.mxu0 0
  %88 = vmatprep.subr.bf16.mxu0 0
  %89 = vmatpush1.bf16.msra.mxu0 0
  %90 = vmatprep.subr.bf16.mxu0 0
  %91 = vmatpush1.bf16.msra.mxu0 0
  %92 = vmatprep.subr.bf16.mxu0 0
  %93 = vmatpush1.bf16.msra.mxu0 0
  %94 = vmatprep.subr.bf16.mxu0 0
  %95 = vmatpush1.bf16.msra.mxu0 0
  %96 = vmatprep.subr.bf16.mxu0 0
  %97 = vmatpush1.bf16.msra.mxu0 0
  %98 = vmatprep.subr.bf16.mxu0 0
  %99 = vmatpush1.bf16.msra.mxu0 0
  %100 = vmatprep.subr.bf16.mxu0 0
  %101 = vmatpush1.bf16.msra.mxu0 0
  %102 = vmatprep.subr.bf16.mxu0 0
  %103 = vmatpush1.bf16.msra.mxu0 0
  %104 = vmatprep.mubr.bf16.mxu0 0
  %105 = vmatmul.mubr.bf16.gmra.mrb[0].mxu0 %v70
  %v106 = vpop.f32.mrb[0].mxu0
  %v107 = vadd.f32 %v41, %v106
  %v108 = vpop.f32.mrb[0].mxu0
  %v109 = vadd.f32 %v45, %v108
  %v110 = vpop.f32.mrb[0].mxu0
  %v111 = vadd.f32 %v41, %v110
  %v112 = vpop.f32.mrb[0].mxu0
  %v113 = vadd.f32 %v45, %v112
  %114 = vdwg.mxu0
  %115 = vst [vmem:[%s7] sm:$0xff] %v107
  %116 = vst [vmem:[%s7 + $0x8] sm:$0xff] %v111
  %v117 = vmax.f32 %v109, 0.0
  %v118 = vmax.f32 %v113, 0.0
  %v119 = vpack.c.bf16 %v118, %v117
  %v120 = vld [vmem:[%s3] sm:$0xf]
  %v121 = vld [vmem:[%s3 + $0x4] sm:$0xf]
  %v122 = vld [vmem:[%s3 + $0x8] sm:$0xf]
  %v123 = vld [vmem:[%s3 + $0xc] sm:$0xf]
  %v124 = vld [vmem:[%s4] sm:$0x1]
  %v126 = vlaneseq
  %v127 = vshrl.u32 %v126, 7
  %v128 = vsub.s32 0, %v127
  %v129 = vrot.slane %v124, %v128
  %v135 = vunpack.c.l.b16 %v120
  %v136 = vunpack.c.l.b16 %v121
  %v137 = vunpack.c.l.b16 %v122
  %v138 = vunpack.c.l.b16 %v123
  %v139 = vpack.c.b16 %v136, %v135
  %v140 = vpack.c.b16 %v138, %v137
  %v144 = vsel %vm68, %v119, 0
  %146 = vmatprep.subr.bf16.mxu0 0
  %147 = vmatpush1.bf16.msra.mxu0 %v139
  %148 = vmatprep.subr.bf16.mxu0 0
  %149 = vmatpush1.bf16.msra.mxu0 %v140
  %150 = vmatprep.subr.bf16.mxu0 0
  %151 = vmatpush1.bf16.msra.mxu0 0
  %152 = vmatprep.subr.bf16.mxu0 0
  %153 = vmatpush1.bf16.msra.mxu0 0
  %154 = vmatprep.subr.bf16.mxu0 0
  %155 = vmatpush1.bf16.msra.mxu0 0
  %156 = vmatprep.subr.bf16.mxu0 0
  %157 = vmatpush1.bf16.msra.mxu0 0
  %158 = vmatprep.subr.bf16.mxu0 0
  %159 = vmatpush1.bf16.msra.mxu0 0
  %160 = vmatprep.subr.bf16.mxu0 0
  %161 = vmatpush1.bf16.msra.mxu0 0
  %162 = vmatprep.subr.bf16.mxu0 0
  %163 = vmatpush1.bf16.msra.mxu0 0
  %164 = vmatprep.subr.bf16.mxu0 0
  %165 = vmatpush1.bf16.msra.mxu0 0
  %166 = vmatprep.subr.bf16.mxu0 0
  %167 = vmatpush1.bf16.msra.mxu0 0
  %168 = vmatprep.subr.bf16.mxu0 0
  %169 = vmatpush1.bf16.msra.mxu0 0
  %170 = vmatprep.subr.bf16.mxu0 0
  %171 = vmatpush1.bf16.msra.mxu0 0
  %172 = vmatprep.subr.bf16.mxu0 0
  %173 = vmatpush1.bf16.msra.mxu0 0
  %174 = vmatprep.subr.bf16.mxu0 0
  %175 = vmatpush1.bf16.msra.mxu0 0
  %176 = vmatprep.subr.bf16.mxu0 0
  %177 = vmatpush1.bf16.msra.mxu0 0
  %178 = vmatprep.mubr.bf16.mxu0 0
  %179 = vmatmul.mubr.bf16.gmra.mrb[0].mxu0 %v144
  %v180 = vpop.f32.mrb[0].mxu0
  %v181 = vadd.f32 %v129, %v180
  %v182 = vpop.f32.mrb[0].mxu0
  %v183 = vpop.f32.mrb[0].mxu0
  %v184 = vadd.f32 %v129, %v183
  %v185 = vpop.f32.mrb[0].mxu0
  %186 = vdwg.mxu0
  %v187 = vmax.f32 %v181, 0.0
  %v188 = vmax.f32 %v184, 0.0
  %v189 = vpack.c.bf16 %v188, %v187
  %v190 = vld [vmem:[%s5] sm:$0xf]
  %v191 = vld [vmem:[%s5 + $0x4] sm:$0xf]
  %v192 = vld [vmem:[%s5 + $0x8] sm:$0xf]
  %v193 = vld [vmem:[%s5 + $0xc] sm:$0xf]
  %v194 = vld [vmem:[%s6] sm:$0x1]
  %v196 = vlaneseq
  %v197 = vshrl.u32 %v196, 7
  %v198 = vsub.s32 0, %v197
  %v199 = vrot.slane %v194, %v198
  %v205 = vunpack.c.l.b16 %v190
  %v206 = vunpack.c.l.b16 %v191
  %v207 = vunpack.c.l.b16 %v192
  %v208 = vunpack.c.l.b16 %v193
  %v209 = vpack.c.b16 %v206, %v205
  %v210 = vpack.c.b16 %v208, %v207
  %v214 = vsel %vm68, %v189, 0
  %216 = vmatprep.subr.bf16.mxu0 0
  %217 = vmatpush1.bf16.msra.mxu0 %v209
  %218 = vmatprep.subr.bf16.mxu0 0
  %219 = vmatpush1.bf16.msra.mxu0 %v210
  %220 = vmatprep.subr.bf16.mxu0 0
  %221 = vmatpush1.bf16.msra.mxu0 0
  %222 = vmatprep.subr.bf16.mxu0 0
  %223 = vmatpush1.bf16.msra.mxu0 0
  %224 = vmatprep.subr.bf16.mxu0 0
  %225 = vmatpush1.bf16.msra.mxu0 0
  %226 = vmatprep.subr.bf16.mxu0 0
  %227 = vmatpush1.bf16.msra.mxu0 0
  %228 = vmatprep.subr.bf16.mxu0 0
  %229 = vmatpush1.bf16.msra.mxu0 0
  %230 = vmatprep.subr.bf16.mxu0 0
  %231 = vmatpush1.bf16.msra.mxu0 0
  %232 = vmatprep.subr.bf16.mxu0 0
  %233 = vmatpush1.bf16.msra.mxu0 0
  %234 = vmatprep.subr.bf16.mxu0 0
  %235 = vmatpush1.bf16.msra.mxu0 0
  %236 = vmatprep.subr.bf16.mxu0 0
  %237 = vmatpush1.bf16.msra.mxu0 0
  %238 = vmatprep.subr.bf16.mxu0 0
  %239 = vmatpush1.bf16.msra.mxu0 0
  %240 = vmatprep.subr.bf16.mxu0 0
  %241 = vmatpush1.bf16.msra.mxu0 0
  %242 = vmatprep.subr.bf16.mxu0 0
  %243 = vmatpush1.bf16.msra.mxu0 0
  %244 = vmatprep.subr.bf16.mxu0 0
  %245 = vmatpush1.bf16.msra.mxu0 0
  %246 = vmatprep.subr.bf16.mxu0 0
  %247 = vmatpush1.bf16.msra.mxu0 0
  %248 = vmatprep.mubr.bf16.mxu0 0
  %249 = vmatmul.mubr.bf16.gmra.mrb[0].mxu0 %v214
  %v250 = vpop.f32.mrb[0].mxu0
  %v251 = vadd.f32 %v199, %v250
  %v252 = vpop.f32.mrb[0].mxu0
  %v253 = vpop.f32.mrb[0].mxu0
  %v254 = vadd.f32 %v199, %v253
  %v255 = vpop.f32.mrb[0].mxu0
  %256 = vdwg.mxu0
  %v257 = vxor.u32 %v251, 2147483648
  %v258 = vxor.u32 %v254, 2147483648
  %v259 = vmul.f32 %v257, 1.442695
  %v260 = vpow.pop %v259
  %v261 = vmul.f32 %v258, 1.442695
  %v262 = vpow.pop %v261
  %v263 = vadd.f32 %v260, 1.0
  %v264 = vadd.f32 %v262, 1.0
  %v265 = vrcp.pop %v263
  %v266 = vmul.f32 1.0, %v265
  %v267 = vrcp.pop %v264
  %v268 = vmul.f32 1.0, %v267
  %269 = vst [vmem:[%s8] sm:$0xff] %v266
  %270 = vst [vmem:[%s8 + $0x8] sm:$0xff] %v268
  // Predicated region
  $region30: #{detr_forward.3} parent=0 // pred_check
    _
  $region31: #{detr_forward.3} parent=0 // pred_check_branch
    %272 = sbr.rel (0) target = $region33
  $region32: #{detr_forward.3} parent=0 // pred_region
    _
  $region33: #{detr_forward.3} parent=0 // pred_fallthru
    _
  // Predicated region
  $region34: #{detr_forward.3} parent=0 // pred_check
    _
  $region35: #{detr_forward.3} parent=0 // pred_check_branch
    %274 = sbr.rel (0) target = $region37
  $region36: #{detr_forward.3} parent=0 // pred_region
    _
  $region37: #{detr_forward.3} parent=0 // pred_fallthru
    _
  // Predicated region
  $region38: #{detr_forward.3} parent=0 // pred_check
    _
  $region39: #{detr_forward.3} parent=0 // pred_check_branch
    %276 = sbr.rel (0) target = $region41
  $region40: #{detr_forward.3} parent=0 // pred_region
    _
  $region41: #{detr_forward.3} parent=0 // pred_fallthru
    _
  // Predicated region
  $region42: #{detr_forward.3} parent=0 // pred_check
    _
  $region43: #{detr_forward.3} parent=0 // pred_check_branch
    %278 = sbr.rel (0) target = $region45
  $region44: #{detr_forward.3} parent=0 // pred_region
    _
  $region45: #{detr_forward.3} parent=0 // pred_fallthru
    _

</llo_original>
